<compile_context>
chip_gen: v7x
topology: tpu7x:2x2x1
jax: 0.10.0
libtpu: 0.0.40
codegen_flags: <defaults>
</compile_context>

<pallas_src>
import functools

import jax
import jax.numpy as jnp
from jax.experimental import pallas as pl
from jax.experimental.pallas import tpu as pltpu

IN_FEATURES = 32
OUT_FEATURES = 2
NUM_GAUSSIANS = 4

_LANES = 128


# ----------------------------- Pallas kernel --------------------------------

def _mdn_kernel(x_ref, w_ref, b_ref, o_ref, *, num_gaussians, go):
    """One fused batch-tile: y = x @ W + b, then per-lane-region activation.

    Column (lane) layout of y:
      [0, G)        : pi logits      -> masked, numerically-stable softmax
      [G, G+GO)     : sigma pre-act  -> exp
      [G+GO, Npad)  : mu + zero-pad  -> identity
    """
    y = jnp.dot(x_ref[...], w_ref[...], preferred_element_type=jnp.float32)
    y = y + b_ref[...]

    col = jax.lax.broadcasted_iota(jnp.int32, y.shape, dimension=1)
    is_pi = col < num_gaussians
    is_sigma = jnp.logical_and(col >= num_gaussians, col < num_gaussians + go)

    # softmax restricted to the pi columns (stable; unselected lanes -> 0)
    m = jnp.max(jnp.where(is_pi, y, -jnp.inf), axis=1, keepdims=True)
    e = jnp.where(is_pi, jnp.exp(y - m), 0.0)
    pi = e / jnp.sum(e, axis=1, keepdims=True)

    # sigma lanes get exp(y); mu lanes (and padding lanes) pass through.
    o_ref[...] = jnp.where(is_pi, pi, jnp.where(is_sigma, jnp.exp(y), y))


# ------------------------------ parameters ----------------------------------

def init_mdn_params(key, in_features, out_features, num_gaussians):
    """Three separate Linear layers, matching nn.Linear's default init."""
    G, O = num_gaussians, out_features
    keys = jax.random.split(key, 6)

    def linear(kw, kb, fin, fout):
        bound = 1.0 / jnp.sqrt(float(fin))
        w = jax.random.uniform(kw, (fin, fout), jnp.float32, -bound, bound)
        b = jax.random.uniform(kb, (1, fout), jnp.float32, -bound, bound)
        return w, b

    wpi, bpi = linear(keys[0], keys[1], in_features, G)
    wsg, bsg = linear(keys[2], keys[3], in_features, O * G)
    wmu, bmu = linear(keys[4], keys[5], in_features, O * G)
    return {"pi": (wpi, bpi), "sigma": (wsg, bsg), "mu": (wmu, bmu)}


def fuse_mdn_params(params):
    """Concat pi|sigma|mu into one weight/bias, zero-padded to 128 lanes."""
    (wpi, bpi), (wsg, bsg), (wmu, bmu) = params["pi"], params["sigma"], params["mu"]
    w = jnp.concatenate([wpi, wsg, wmu], axis=1)
    b = jnp.concatenate([bpi, bsg, bmu], axis=1)
    n = w.shape[1]
    n_pad = pl.cdiv(max(n, _LANES), _LANES) * _LANES
    if n_pad != n:
        w = jnp.pad(w, ((0, 0), (0, n_pad - n)))
        b = jnp.pad(b, ((0, 0), (0, n_pad - n)))
    return {"w": w, "b": b}


# ------------------------------ forward --------------------------------------

def mdn_forward(fused, x, *, num_gaussians, out_features, block_b=8):
    """x: (B, in_features) -> (pi (B,G), sigma (B,G,O), mu (B,G,O))."""
    x = x.astype(jnp.float32)
    B, in_features = x.shape
    G = num_gaussians
    GO = G * out_features
    w, b = fused["w"], fused["b"]
    n_pad = w.shape[1]

    bp = pl.cdiv(max(B, block_b), block_b) * block_b
    if bp != B:
        x = jnp.pad(x, ((0, bp - B), (0, 0)))

    kernel = functools.partial(_mdn_kernel, num_gaussians=G, go=GO)
    out = pl.pallas_call(
        kernel,
        out_shape=jax.ShapeDtypeStruct((bp, n_pad), jnp.float32),
        grid=(bp // block_b,),
        in_specs=[pl.BlockSpec((block_b, in_features), lambda i: (i, 0)),
                  pl.BlockSpec((in_features, n_pad), lambda i: (0, 0)),
                  pl.BlockSpec((1, n_pad), lambda i: (0, 0))],
        out_specs=pl.BlockSpec((block_b, n_pad), lambda i: (i, 0)),
        compiler_params=pltpu.CompilerParams(
            dimension_semantics=("parallel",)),
    )(x, w, b)

    out = out[:B]
    pi = out[:, :G]
    sigma = out[:, G:G + GO].reshape(B, G, out_features)
    mu = out[:, G + GO:G + 2 * GO].reshape(B, G, out_features)
    return pi, sigma, mu


def mdn_reference(params, x, num_gaussians, out_features):
    """Pure-JAX reference matching the PyTorch forward."""
    (wpi, bpi), (wsg, bsg), (wmu, bmu) = params["pi"], params["sigma"], params["mu"]
    pi = jax.nn.softmax(x @ wpi + bpi, axis=1)
    sigma = jnp.exp(x @ wsg + bsg).reshape(-1, num_gaussians, out_features)
    mu = (x @ wmu + bmu).reshape(-1, num_gaussians, out_features)
    return pi, sigma, mu


# -------------------------------- main ----------------------------------------

if __name__ == "__main__":
    key = jax.random.PRNGKey(0)
    k_par, k_x = jax.random.split(key)

    B = 16
    params = init_mdn_params(k_par, IN_FEATURES, OUT_FEATURES, NUM_GAUSSIANS)
    fused = fuse_mdn_params(params)
    x = jax.random.normal(k_x, (B, IN_FEATURES), jnp.float32)

    fwd = jax.jit(functools.partial(mdn_forward, fused,
                                    num_gaussians=NUM_GAUSSIANS,
                                    out_features=OUT_FEATURES))
    pi, sigma, mu = fwd(x)
    jax.block_until_ready((pi, sigma, mu))

    assert pi.shape == (B, NUM_GAUSSIANS)
    assert sigma.shape == (B, NUM_GAUSSIANS, OUT_FEATURES)
    assert mu.shape == (B, NUM_GAUSSIANS, OUT_FEATURES)

    # sanity vs pure-JAX reference (loose tolerance for TPU matmul precision)
    pi_r, sg_r, mu_r = mdn_reference(params, x, NUM_GAUSSIANS, OUT_FEATURES)
    assert jnp.allclose(pi, pi_r, rtol=1e-2, atol=1e-2)
    assert jnp.allclose(sigma, sg_r, rtol=1e-2, atol=1e-2)
    assert jnp.allclose(mu, mu_r, rtol=1e-2, atol=1e-2)
    assert jnp.allclose(jnp.sum(pi, axis=1), 1.0, atol=1e-5)

    print("KERNEL_OK")
</pallas_src>

<mosaic_0001>
module attributes {stable_mosaic.version = 11 : i64} {
  func.func @_mdn_kernel(%arg0: i32, %arg1: memref<8x32xf32, #tpu.memory_space<vmem>>, %arg2: memref<32x128xf32, #tpu.memory_space<vmem>>, %arg3: memref<1x128xf32, #tpu.memory_space<vmem>>, %arg4: memref<8x128xf32, #tpu.memory_space<vmem>>) attributes {dimension_semantics = [#tpu.dimension_semantics<parallel>], iteration_bounds = array<i64: 2>, scalar_prefetch = 0 : i64, scratch_operands = 0 : i64, tpu.core_type = #tpu.core_type<tc>, window_params = [{transform_indices = @transform_0, window_bounds = array<i64: 8, 32>}, {pipeline_mode = #tpu.pipeline_mode<synchronous>, transform_indices = @transform_1, window_bounds = array<i64: 32, 128>}, {pipeline_mode = #tpu.pipeline_mode<synchronous>, transform_indices = @transform_2, window_bounds = array<i64: 1, 128>}, {transform_indices = @transform_3, window_bounds = array<i64: 8, 128>}]} {
    %c0 = arith.constant 0 : index
    %c0_0 = arith.constant 0 : index
    %0 = vector.load %arg1[%c0, %c0_0] : memref<8x32xf32, #tpu.memory_space<vmem>>, vector<8x32xf32>
    %c0_1 = arith.constant 0 : index
    %c0_2 = arith.constant 0 : index
    %1 = vector.load %arg2[%c0_1, %c0_2] : memref<32x128xf32, #tpu.memory_space<vmem>>, vector<32x128xf32>
    %cst = arith.constant dense<0.000000e+00> : vector<8x128xf32>
    %2 = tpu.matmul %0, %1, %cst {dimension_numbers = #tpu.dot_dimension_numbers<[1], [0], [0], [1], [0, 0, 1, 1], [], []>} : vector<8x32xf32>, vector<32x128xf32>, vector<8x128xf32> -> vector<8x128xf32>
    %c0_3 = arith.constant 0 : index
    %c0_4 = arith.constant 0 : index
    %3 = vector.load %arg3[%c0_3, %c0_4] : memref<1x128xf32, #tpu.memory_space<vmem>>, vector<1x128xf32>
    %4 = vector.broadcast %3 : vector<1x128xf32> to vector<8x128xf32>
    %5 = arith.addf %2, %4 : vector<8x128xf32>
    %6 = tpu.iota {dimensions = array<i32: 1>} : vector<8x128xi32>
    %c4_i32 = arith.constant 4 : i32
    %7 = vector.broadcast %c4_i32 : i32 to vector<8x128xi32>
    %8 = arith.cmpi slt, %6, %7 : vector<8x128xi32>
    %c4_i32_5 = arith.constant 4 : i32
    %9 = vector.broadcast %c4_i32_5 : i32 to vector<8x128xi32>
    %10 = arith.cmpi sge, %6, %9 : vector<8x128xi32>
    %c12_i32 = arith.constant 12 : i32
    %11 = vector.broadcast %c12_i32 : i32 to vector<8x128xi32>
    %12 = arith.cmpi slt, %6, %11 : vector<8x128xi32>
    %13 = arith.andi %10, %12 : vector<8x128xi1>
    %cst_6 = arith.constant 0xFF800000 : f32
    %14 = vector.broadcast %cst_6 : f32 to vector<8x128xf32>
    %15 = arith.select %8, %5, %14 : vector<8x128xi1>, vector<8x128xf32>
    %cst_7 = arith.constant dense<0xFF800000> : vector<8xf32>
    %16 = vector.multi_reduction <maximumf>, %15, %cst_7 [1] : vector<8x128xf32> to vector<8xf32>
    %17 = vector.shape_cast %16 : vector<8xf32> to vector<8x1xf32>
    %18 = vector.broadcast %17 : vector<8x1xf32> to vector<8x128xf32>
    %19 = arith.subf %5, %18 : vector<8x128xf32>
    %20 = math.exp %19 : vector<8x128xf32>
    %cst_8 = arith.constant 0.000000e+00 : f32
    %21 = vector.broadcast %cst_8 : f32 to vector<8x128xf32>
    %22 = arith.select %8, %20, %21 : vector<8x128xi1>, vector<8x128xf32>
    %cst_9 = arith.constant dense<0.000000e+00> : vector<8xf32>
    %23 = vector.multi_reduction <add>, %22, %cst_9 [1] : vector<8x128xf32> to vector<8xf32>
    %24 = vector.shape_cast %23 : vector<8xf32> to vector<8x1xf32>
    %25 = vector.broadcast %24 : vector<8x1xf32> to vector<8x128xf32>
    %26 = arith.divf %22, %25 : vector<8x128xf32>
    %27 = math.exp %5 : vector<8x128xf32>
    %28 = arith.select %13, %27, %5 : vector<8x128xi1>, vector<8x128xf32>
    %29 = arith.select %8, %26, %28 : vector<8x128xi1>, vector<8x128xf32>
    %c0_10 = arith.constant 0 : index
    %c0_11 = arith.constant 0 : index
    %30 = vector.load %arg4[%c0_10, %c0_11] : memref<8x128xf32, #tpu.memory_space<vmem>>, vector<8x128xf32>
    tpu.vector_store %arg4[%c0_10, %c0_11], %29 {strides = array<i32>} : memref<8x128xf32, #tpu.memory_space<vmem>>, vector<8x128xf32>,
    return
  }
  func.func @transform_0(%arg0: i32) -> (i32, i32) {
    %c0_i32 = arith.constant 0 : i32
    %c0_i32_0 = arith.constant 0 : i32
    return %arg0, %c0_i32 : i32, i32
  }
  func.func @transform_1(%arg0: i32) -> (i32, i32) {
    %c0_i32 = arith.constant 0 : i32
    %c0_i32_0 = arith.constant 0 : i32
    %c0_i32_1 = arith.constant 0 : i32
    return %c0_i32, %c0_i32_0 : i32, i32
  }
  func.func @transform_2(%arg0: i32) -> (i32, i32) {
    %c0_i32 = arith.constant 0 : i32
    %c0_i32_0 = arith.constant 0 : i32
    %c0_i32_1 = arith.constant 0 : i32
    return %c0_i32, %c0_i32_0 : i32, i32
  }
  func.func @transform_3(%arg0: i32) -> (i32, i32) {
    %c0_i32 = arith.constant 0 : i32
    %c0_i32_0 = arith.constant 0 : i32
    return %arg0, %c0_i32 : i32, i32
  }
}

</mosaic_0001>

<llo_original>
// kernel: mdn_forward.1
$region0: #{mdn_forward.1}
  #allocation0 [shape = 'u32[]', space=smem, size = 0x4, offset = 0x4, fixed_abs, tag = 'smem constant byte address 0x4 - core index']
  #allocation1 [shape = 'u32[144,128]{1,0:T(1,128)}', space=vmem, size = 0x12000, scoped, tag = 'internal scratch']
  %s0 = inlined_call_operand.hbm [shape: f32[16,32], index: 0, kind: input, shape index: {}]
  %s1 = inlined_call_operand.hbm [shape: f32[32,128], index: 1, kind: input, shape index: {}]
  %s2 = inlined_call_operand.vmem [shape: f32[1,128], index: 2, kind: input, shape index: {}]
  %s3 = inlined_call_operand.vmem [shape: f32[16,128], index: 3, kind: output, shape index: {}]
  %s4 = sld [smem:[#allocation0]]
  $region53: #{mdn_forward.1} parent=0
    _
  %s6 = ssub.s32 1, %s4
  %s7 = scalar_select 0, %s6, %s4
  $region1: #{mdn_forward.1} parent=0
    #allocation2 [shape = 'u8[8192]{0}', space=vmem, size = 0x2000, scoped, tag = 'input window, operand 0']
    #allocation3 [shape = 's32[2]{0}', space=sflag, size = 0x8, scoped, tag = 'scoped memory for mdn_forward.1']
    #allocation4 [shape = 'u8[16384]{0}', space=vmem, size = 0x4000, scoped, tag = 'input window, operand 1, single buffered']
    #allocation5 [shape = 's32[1]{0}', space=sflag, size = 0x4, scoped, tag = 'scoped memory for mdn_forward.1']
    %8 = vsyncpa [#allocation3], 0
    %s9 = scalar_lea.sflag [#allocation3], 1
    %10 = vsyncpa %s9, 0
    %11 = vsyncpa [#allocation5], 0
    loop: start=0, step=1, limit=4
    $region2: #{mdn_forward.1} parent=1 // loop_pre_header
      _
    $region3: #{mdn_forward.1} parent=1 // loop_header
      %s13 = sphi 0, %s17
      %p14 = scmp.ge.s32.totalorder %s13, 4
      %s23 = sphi 0, %s25
      %s26 = sphi 0, %s23
      %s27 = sphi 0, %s26
      %s43 = sphi 0, %s27
      %s47 = sphi 0, %s47
      %s49 = sphi 0, %s47
      %s50 = sphi 0, %s49
      %s64 = sphi 0, %s50
      %s68 = sphi 0, %s68
      %s70 = sphi 0, %s68
      %s71 = sphi 0, %s70
      %s85 = sphi 0, %s71
      %s91 = sphi 0, %s93
      %s94 = sphi 0, %s91
      %s95 = sphi 0, %s94
      %s111 = sphi 0, %s95
    $region4: #{mdn_forward.1} parent=1 // loop_header_branch
      %16 = sbr.rel (%p14) target = $region8
    $region5: #{mdn_forward.1} parent=1 // loop_body
      %s18 = ssub.s32 %s13, 1
      %s19 = ssub.s32 %s13, 2
      %s20 = sadd.s32 %s13, 1
      %s21 = ssub.s32 %s13, %s20
      %p22 = scmp.eq.s32.totalorder %s21, 0
      %s24 = sadd.s32 %s23, 1
      %s25 = scalar_select %p22, %s23, %s24
      %p28 = pneg %p22
      %p29 = scmp.eq.s32.totalorder %s13, 1
      %p30 = por %p28, %p29
      %p31 = scmp.ne.s32.totalorder %s23, %s26
      %p32 = scmp.eq.s32.totalorder %s13, 0
      %p33 = por %p31, %p32
      %p34 = scmp.ne.s32.totalorder %s23, %s26
      %p35 = scmp.eq.s32.totalorder %s18, 1
      %p36 = por %p34, %p35
      %p37 = scmp.ne.s32.totalorder %s26, %s27
      %p38 = scmp.eq.s32.totalorder %s18, 0
      %p39 = por %p37, %p38
      %p40 = scmp.ne.s32.totalorder %s26, %s27
      %p41 = scmp.eq.s32.totalorder %s19, 1
      %p42 = por %p40, %p41
      %p44 = scmp.ne.s32.totalorder %s27, %s43
      %p45 = scmp.eq.s32.totalorder %s19, 0
      %p46 = por %p44, %p45
      %s48 = sadd.s32 %s47, 1
      %p51 = scmp.eq.s32.totalorder %s13, 1
      %p52 = scmp.ne.s32.totalorder %s47, %s49
      %p53 = scmp.eq.s32.totalorder %s13, 0
      %p54 = por %p52, %p53
      %p55 = scmp.ne.s32.totalorder %s47, %s49
      %p56 = scmp.eq.s32.totalorder %s18, 1
      %p57 = por %p55, %p56
      %p58 = scmp.ne.s32.totalorder %s49, %s50
      %p59 = scmp.eq.s32.totalorder %s18, 0
      %p60 = por %p58, %p59
      %p61 = scmp.ne.s32.totalorder %s49, %s50
      %p62 = scmp.eq.s32.totalorder %s19, 1
      %p63 = por %p61, %p62
      %p65 = scmp.ne.s32.totalorder %s50, %s64
      %p66 = scmp.eq.s32.totalorder %s19, 0
      %p67 = por %p65, %p66
      %s69 = sadd.s32 %s68, 1
      %p72 = scmp.eq.s32.totalorder %s13, 1
      %p73 = scmp.ne.s32.totalorder %s68, %s70
      %p74 = scmp.eq.s32.totalorder %s13, 0
      %p75 = por %p73, %p74
      %p76 = scmp.ne.s32.totalorder %s68, %s70
      %p77 = scmp.eq.s32.totalorder %s18, 1
      %p78 = por %p76, %p77
      %p79 = scmp.ne.s32.totalorder %s70, %s71
      %p80 = scmp.eq.s32.totalorder %s18, 0
      %p81 = por %p79, %p80
      %p82 = scmp.ne.s32.totalorder %s70, %s71
      %p83 = scmp.eq.s32.totalorder %s19, 1
      %p84 = por %p82, %p83
      %p86 = scmp.ne.s32.totalorder %s71, %s85
      %p87 = scmp.eq.s32.totalorder %s19, 0
      %p88 = por %p86, %p87
      %s89 = ssub.s32 %s13, %s20
      %p90 = scmp.eq.s32.totalorder %s89, 0
      %s92 = sadd.s32 %s91, 1
      %s93 = scalar_select %p90, %s91, %s92
      %p96 = pneg %p90
      %p97 = scmp.eq.s32.totalorder %s13, 1
      %p98 = por %p96, %p97
      %p99 = scmp.ne.s32.totalorder %s91, %s94
      %p100 = scmp.eq.s32.totalorder %s13, 0
      %p101 = por %p99, %p100
      %p102 = scmp.ne.s32.totalorder %s91, %s94
      %p103 = scmp.eq.s32.totalorder %s18, 1
      %p104 = por %p102, %p103
      %p105 = scmp.ne.s32.totalorder %s94, %s95
      %p106 = scmp.eq.s32.totalorder %s18, 0
      %p107 = por %p105, %p106
      %p108 = scmp.ne.s32.totalorder %s94, %s95
      %p109 = scmp.eq.s32.totalorder %s19, 1
      %p110 = por %p108, %p109
      %p112 = scmp.ne.s32.totalorder %s95, %s111
      %p113 = scmp.eq.s32.totalorder %s19, 0
      %p114 = por %p112, %p113
      %p115 = scmp.le.s32.totalorder 1, %s13
      %p116 = scmp.lt.s32.totalorder %s13, 3
      %p117 = pnand %p115, %p116
      %p118 = pneg %p117
      // Predicated region
      $region9: #{mdn_forward.1} parent=5 // pred_check
        _
      $region10: #{mdn_forward.1} parent=5 // pred_check_branch
        %120 = sbr.rel (%p117) target = $region12
      $region11: #{mdn_forward.1} parent=5 // pred_region
        %s121 = ssub.s32 %s13, 1
        // Predicated region
        $region13: #{mdn_forward.1} parent=11 // pred_check
          %p122 = pneg %p60
        $region14: #{mdn_forward.1} parent=11 // pred_check_branch
          %124 = sbr.rel (%p122) target = $region16
        $region15: #{mdn_forward.1} parent=11 // pred_region
          %s126 = ssub.s32 512, 512
          %127 = vsyncadd [#allocation5], %s126
          %s128 = sshll.u32 [#allocation4], 4
          %s129 = int_to_ptr.vmem [resolvable:$true] %s128
          %134 = dma.hbm_to_vmem [thread:$0]  %s1, 512, %s129, [#allocation5], 128, 128, 8
        $region16: #{mdn_forward.1} parent=11 // pred_fallthru
          _
        // Predicated region
        $region17: #{mdn_forward.1} parent=11 // pred_check
          %p135 = pneg %p81
        $region18: #{mdn_forward.1} parent=11 // pred_check_branch
          %137 = sbr.rel (%p135) target = $region20
        $region19: #{mdn_forward.1} parent=11 // pred_region
          _
        $region20: #{mdn_forward.1} parent=11 // pred_fallthru
          _
      $region12: #{mdn_forward.1} parent=5 // pred_fallthru
        _
      %p138 = scmp.lt.s32.totalorder %s13, 2
      // Predicated region
      $region21: #{mdn_forward.1} parent=5 // pred_check
        %p139 = pneg %p138
      $region22: #{mdn_forward.1} parent=5 // pred_check_branch
        %141 = sbr.rel (%p139) target = $region24
      $region23: #{mdn_forward.1} parent=5 // pred_region
        // Predicated region
        $region25: #{mdn_forward.1} parent=23 // pred_check
          %p142 = pneg %p33
        $region26: #{mdn_forward.1} parent=23 // pred_check_branch
          %144 = sbr.rel (%p142) target = $region28
        $region27: #{mdn_forward.1} parent=23 // pred_region
          %s145 = sand.u32 %s23, 1
          %s146 = scalar_lea.sflag [#allocation3], %s145
          %s147 = sand.u32 %s23, 1
          %s148 = smul.addr %s147, 8
          %s149 = scalar_lea.vmem [#allocation2], %s148
          %s151 = ssub.s32 128, 128
          %152 = vsyncadd %s146, %s151
          %s153 = smul.addr %s13, 128
          %s154 = scalar_lea.hbm %s0, %s153
          %s156 = sshll.u32 %s149, 4
          %s157 = int_to_ptr.vmem [resolvable:$true] %s156
          %159 = dma.hbm_to_vmem [thread:$0]  %s154, 128, %s157, %s146
        $region28: #{mdn_forward.1} parent=23 // pred_fallthru
          _
      $region24: #{mdn_forward.1} parent=5 // pred_fallthru
        _
      %p160 = scmp.le.s32.totalorder 1, %s13
      %p161 = scmp.lt.s32.totalorder %s13, 3
      %p162 = pnand %p160, %p161
      %p163 = pneg %p162
      // Predicated region
      $region29: #{mdn_forward.1} parent=5 // pred_check
        _
      $region30: #{mdn_forward.1} parent=5 // pred_check_branch
        %165 = sbr.rel (%p162) target = $region32
      $region31: #{mdn_forward.1} parent=5 // pred_region
        %s166 = ssub.s32 %s13, 1
        %s167 = sand.u32 %s26, 1
        %s168 = scalar_lea.sflag [#allocation3], %s167
        %s169 = sand.u32 %s26, 1
        %s170 = smul.addr %s169, 8
        %s171 = scalar_lea.vmem [#allocation2], %s170
        // Predicated region
        $region33: #{mdn_forward.1} parent=31 // pred_check
          %p172 = pneg %p39
        $region34: #{mdn_forward.1} parent=31 // pred_check_branch
          %174 = sbr.rel (%p172) target = $region36
        $region35: #{mdn_forward.1} parent=31 // pred_region
          %175 = dma.done %s168, 128
        $region36: #{mdn_forward.1} parent=31 // pred_fallthru
          _
        // Predicated region
        $region37: #{mdn_forward.1} parent=31 // pred_check
          %p176 = pneg %p60
        $region38: #{mdn_forward.1} parent=31 // pred_check_branch
          %178 = sbr.rel (%p176) target = $region40
        $region39: #{mdn_forward.1} parent=31 // pred_region
          %179 = dma.done [#allocation5], 512
        $region40: #{mdn_forward.1} parent=31 // pred_fallthru
          _
        %s180 = sand.u32 %s26, 1
        %s181 = scalar_lea.sflag [#allocation3], %s180
        %s182 = sand.u32 %s26, 1
        %s183 = smul.addr %s182, 8
        %s184 = scalar_lea.vmem [#allocation2], %s183
        %p185 = pneg %p39
        %p186 = pneg %p36
        %p187 = pneg %p60
        %p188 = pneg %p57
        %p189 = pneg %p81
        %p190 = pneg %p78
        %p191 = pneg %p107
        %p192 = pneg %p104
        %p193 = scmp.lt.s32.totalorder %s18, 1
        %s194 = scalar_select %p193, %s18, 1
        %s195 = smul.addr %s194, 8
        %s196 = scalar_lea.vmem %s3, %s195
        %p197 = scmp.lt.s32.totalorder %s18, 1
        %s198 = scalar_select %p197, %s18, 1
        %s199 = smul.addr %s198, 8
        %s200 = scalar_lea.vmem %s3, %s199
        %v201 = vld [vmem:[%s171] sm:$0xff]
        %v202 = vld [vmem:[#allocation4] sm:$0xff]
        %v203 = vld [vmem:[#allocation4 + $0x8] sm:$0xff]
        %v204 = vld [vmem:[#allocation4 + $0x10] sm:$0xff]
        %v205 = vld [vmem:[#allocation4 + $0x18] sm:$0xff]
        %v206 = vld [vmem:[%s2] sm:$0x1]
        %v208 = vlaneseq
        %v209 = vshrl.u32 %v208, 7
        %v210 = vsub.s32 0, %v209
        %v211 = vrot.slane %v206, %v210
        %vm213 = vcmask 261120
        %v215 = vsel %vm213, %v201, 0
        %217 = vmatprep.subr.mxu0 0.0
        %218 = vmatpush1.msra.mxu0 %v202
        %219 = vmatprep.subr.mxu0 0.0
        %220 = vmatpush1.msra.mxu0 %v203
        %221 = vmatprep.subr.mxu0 0.0
        %222 = vmatpush1.msra.mxu0 %v204
        %223 = vmatprep.subr.mxu0 0.0
        %224 = vmatpush1.msra.mxu0 %v205
        %225 = vmatprep.subr.mxu0 0.0
        %226 = vmatpush1.msra.mxu0 0.0
        %227 = vmatprep.subr.mxu0 0.0
        %228 = vmatpush1.msra.mxu0 0.0
        %229 = vmatprep.subr.mxu0 0.0
        %230 = vmatpush1.msra.mxu0 0.0
        %231 = vmatprep.subr.mxu0 0.0
        %232 = vmatpush1.msra.mxu0 0.0
        %233 = vmatprep.subr.mxu0 0.0
        %234 = vmatpush1.msra.mxu0 0.0
        %235 = vmatprep.subr.mxu0 0.0
        %236 = vmatpush1.msra.mxu0 0.0
        %237 = vmatprep.subr.mxu0 0.0
        %238 = vmatpush1.msra.mxu0 0.0
        %239 = vmatprep.subr.mxu0 0.0
        %240 = vmatpush1.msra.mxu0 0.0
        %241 = vmatprep.subr.mxu0 0.0
        %242 = vmatpush1.msra.mxu0 0.0
        %243 = vmatprep.subr.mxu0 0.0
        %244 = vmatpush1.msra.mxu0 0.0
        %245 = vmatprep.subr.mxu0 0.0
        %246 = vmatpush1.msra.mxu0 0.0
        %247 = vmatprep.subr.mxu0 0.0
        %248 = vmatpush1.msra.mxu0 0.0
        %249 = vmatprep.subr.mxu0 0.0
        %250 = vmatpush1.msra.mxu0 0.0
        %251 = vmatprep.subr.mxu0 0.0
        %252 = vmatpush1.msra.mxu0 0.0
        %253 = vmatprep.subr.mxu0 0.0
        %254 = vmatpush1.msra.mxu0 0.0
        %255 = vmatprep.subr.mxu0 0.0
        %256 = vmatpush1.msra.mxu0 0.0
        %257 = vmatprep.subr.mxu0 0.0
        %258 = vmatpush1.msra.mxu0 0.0
        %259 = vmatprep.subr.mxu0 0.0
        %260 = vmatpush1.msra.mxu0 0.0
        %261 = vmatprep.subr.mxu0 0.0
        %262 = vmatpush1.msra.mxu0 0.0
        %263 = vmatprep.subr.mxu0 0.0
        %264 = vmatpush1.msra.mxu0 0.0
        %265 = vmatprep.subr.mxu0 0.0
        %266 = vmatpush1.msra.mxu0 0.0
        %267 = vmatprep.subr.mxu0 0.0
        %268 = vmatpush1.msra.mxu0 0.0
        %269 = vmatprep.subr.mxu0 0.0
        %270 = vmatpush1.msra.mxu0 0.0
        %271 = vmatprep.subr.mxu0 0.0
        %272 = vmatpush1.msra.mxu0 0.0
        %273 = vmatprep.subr.mxu0 0.0
        %274 = vmatpush1.msra.mxu0 0.0
        %275 = vmatprep.subr.mxu0 0.0
        %276 = vmatpush1.msra.mxu0 0.0
        %277 = vmatprep.subr.mxu0 0.0
        %278 = vmatpush1.msra.mxu0 0.0
        %279 = vmatprep.subr.mxu0 0.0
        %280 = vmatpush1.msra.mxu0 0.0
        %281 = vmatprep.mubr.f32.mxu0 0.0
        %282 = vmatmul.mubr.f32.gmra.mrb[0].mxu0 %v215
        %v283 = vpop.f32.mrb[0].mxu0
        %v284 = vadd.f32 %v211, %v283
        %v285 = vpop.f32.mrb[0].mxu0
        %286 = vdwg.mxu0
        %v287 = vlaneseq
        %v288 = vand.u32 %v287, 127
        %vm289 = vcmp.lt.s32.totalorder %v288, 4
        %vm290 = vcmp.ge.s32.totalorder %v288, 4
        %vm291 = vcmp.lt.s32.totalorder %v288, 12
        %vm292 = vmand %vm290, %vm291
        %v293 = vsel %vm289, %v284, -inf
        %294 = vmax.xlane.f32.xlu0 %v293
        %v295 = vpop.xlane.xlu0 %294
        %v296 = vsub.f32 %v284, %v295
        %v297 = vmul.f32 %v296, 1.442695
        %v298 = vpow.pop %v297
        %v299 = vsel %vm289, %v298, 0.0
        %300 = vadd.xlane.f32.xlu0 %v299
        %v301 = vpop.xlane.xlu0 %300
        %v302 = vrcp.pop %v301
        %v303 = vmul.f32 %v299, %v302
        %v304 = vmul.f32 %v284, 1.442695
        %v305 = vpow.pop %v304
        %v306 = vsel %vm292, %v305, %v284
        %v307 = vsel %vm289, %v303, %v306
        %308 = vst [vmem:[%s200] sm:$0xff] %v307
        %p309 = scmp.lt.s32.totalorder %s18, 1
        %s310 = scalar_select %p309, %s18, 1
        %s311 = smul.addr %s310, 8
        %s312 = scalar_lea.vmem %s3, %s311
        // Predicated region
        $region41: #{mdn_forward.1} parent=31 // pred_check
          %p313 = pneg %p104
        $region42: #{mdn_forward.1} parent=31 // pred_check_branch
          %315 = sbr.rel (%p313) target = $region44
        $region43: #{mdn_forward.1} parent=31 // pred_region
          _
        $region44: #{mdn_forward.1} parent=31 // pred_fallthru
          _
      $region32: #{mdn_forward.1} parent=5 // pred_fallthru
        _
      %p316 = scmp.le.s32.totalorder 2, %s13
      // Predicated region
      $region45: #{mdn_forward.1} parent=5 // pred_check
        %p317 = pneg %p316
      $region46: #{mdn_forward.1} parent=5 // pred_check_branch
        %319 = sbr.rel (%p317) target = $region48
      $region47: #{mdn_forward.1} parent=5 // pred_region
        %s320 = ssub.s32 %s13, 2
        // Predicated region
        $region49: #{mdn_forward.1} parent=47 // pred_check
          %p321 = pneg %p110
        $region50: #{mdn_forward.1} parent=47 // pred_check_branch
          %323 = sbr.rel (%p321) target = $region52
        $region51: #{mdn_forward.1} parent=47 // pred_region
          %p324 = scmp.lt.s32.totalorder %s19, 1
          %s325 = scalar_select %p324, %s19, 1
          %s326 = smul.addr %s325, 8
          %s327 = scalar_lea.vmem %s3, %s326
        $region52: #{mdn_forward.1} parent=47 // pred_fallthru
          _
      $region48: #{mdn_forward.1} parent=5 // pred_fallthru
        _
    $region6: #{mdn_forward.1} parent=1 // loop_footer
      %s17 = sadd.s32 1, %s13
    $region7: #{mdn_forward.1} parent=1 // loop_footer_branch
      %12 = sbr.rel target = $region3
    $region8: #{mdn_forward.1} parent=1 // loop_exit
      _
    %328 = vsyncpa [#allocation3], 1
    %s329 = scalar_lea.sflag [#allocation3], 1
    %330 = vsyncpa %s329, 1
    %331 = vsyncpa [#allocation5], 1

</llo_original>
